<compile_context>
chip_gen: v6e
topology: v6e:2x2x1
jax: 0.10.0
libtpu: 0.0.40
codegen_flags: <defaults>
</compile_context>

<pallas_src>
import functools

import jax
import jax.numpy as jnp
from jax.experimental import pallas as pl
from jax.experimental.pallas import tpu as pltpu

_LANE = 128


def _leaky_relu(x, negative_slope=0.01):
    # matches torch.nn.functional.leaky_relu default slope
    return jnp.where(x > 0, x, negative_slope * x)


def _round_up(n, m):
    return (n + m - 1) // m * m


def dueling_dqn_kernel(x_ref, w1_ref, w2_ref, w3_ref, wh_ref, b_ref, out_ref,
                       *, acts_dtype):
    """One batch tile: x_ref [in, TB]  ->  out_ref [out, TB] (Q-values)."""
    h1 = w1_ref.shape[0]
    h2 = w2_ref.shape[0]
    h3 = w3_ref.shape[0]

    # All biases in one small operand; static slices are free.
    b_all = b_ref[...]                          # [h1+h2+h3+out, 1] f32
    b1 = b_all[:h1]
    b2 = b_all[h1:h1 + h2]
    b3 = b_all[h1 + h2:h1 + h2 + h3]
    bh = b_all[h1 + h2 + h3:]

    def layer(w_ref, a, b):
        # MXU matmul with f32 accumulation; bias + leaky_relu in f32 (safe on
        # v5e), then cast back to the compute dtype for the next MXU pass.
        y = jnp.dot(w_ref[...], a, preferred_element_type=jnp.float32) + b
        return _leaky_relu(y).astype(acts_dtype)

    a = x_ref[...]                              # [in, TB]
    a = layer(w1_ref, a, b1)                    # [h1, TB]
    a = layer(w2_ref, a, b2)                    # [h2, TB]
    a = layer(w3_ref, a, b3)                    # [h3, TB]

    # Folded dueling head: Q = W_eff @ h + b_eff  (single MXU pass, no reduce).
    q = jnp.dot(wh_ref[...], a, preferred_element_type=jnp.float32) + bh
    out_ref[...] = q.astype(out_ref.dtype)


def _choose_batch_tiling(batch, tb):
    """Pad batch to lane multiples; minimize grid steps, but give v7x 2 tiles."""
    tb = _round_up(max(int(tb), _LANE), _LANE)
    pb = _round_up(max(int(batch), 1), _LANE)
    if pb > tb:
        tile = tb                                   # many fat steps
    elif pb >= 2048:
        tile = _round_up(pl.cdiv(pb, 2), _LANE)     # 2 steps -> both v7x TCs
    else:
        tile = pb                                   # one step: overhead dominates
    pb = _round_up(pb, tile)
    return pb, tile


def dueling_dqn_forward(x, params, *, tb=8192, use_bf16=True):
    """x: [B, input_size] f32. params: PyTorch-layout weights [out_f, in_f], biases [out_f]."""
    B, input_size = x.shape
    w1, w2, w3 = params["w1"], params["w2"], params["w3"]
    wa, wv = params["wa"], params["wv"]
    h1, h2, h3 = w1.shape[0], w2.shape[0], w3.shape[0]
    output_size = wa.shape[0]

    compute_dtype = jnp.bfloat16 if use_bf16 else jnp.float32
    f32 = jnp.float32

    # ---- Fold the dueling combine into one effective head (f32, O(out*h3)) --
    wa32, wv32 = wa.astype(f32), wv.astype(f32)
    ba32, bv32 = params["ba"].astype(f32), params["bv"].astype(f32)
    center = jnp.eye(output_size, dtype=f32) - jnp.full(
        (output_size, output_size), 1.0 / output_size, f32)
    w_head = center @ wa32 + wv32               # [out, h3]
    b_head = ba32 + bv32 - jnp.mean(ba32)       # [out]

    # ---- Operands ------------------------------------------------------------
    b_col = jnp.concatenate(
        [params["b1"].astype(f32), params["b2"].astype(f32),
         params["b3"].astype(f32), b_head]).reshape(-1, 1)   # [h1+h2+h3+out, 1]
    w1c = w1.astype(compute_dtype)
    w2c = w2.astype(compute_dtype)
    w3c = w3.astype(compute_dtype)
    whc = w_head.astype(compute_dtype)

    # Lane-dense layout: batch on the 128-lane axis.
    pB, TB = _choose_batch_tiling(B, tb)
    xT = x.astype(compute_dtype).T              # [in, B]
    if pB != B:
        xT = jnp.pad(xT, ((0, 0), (0, pB - B)))
    grid = (pB // TB,)

    batch_map = lambda i: (0, i)     # x / out: new batch block each grid step
    const_map = lambda i: (0, 0)     # weights / biases: resident in VMEM

    # ---- VMEM / cost bookkeeping ---------------------------------------------
    cdt = jnp.dtype(compute_dtype).itemsize
    weight_bytes = cdt * (h1 * input_size + h2 * h1 + h3 * h2 + output_size * h3)
    bias_bytes = 4 * (h1 + h2 + h3 + output_size)
    per_step_bytes = TB * (2 * cdt * input_size          # x block (double-buffered)
                           + 2 * 4 * output_size          # out block (double-buffered)
                           + (4 + cdt) * (h1 + h2 + h3))  # intermediates
    vmem_limit = int(min(max(2 * (per_step_bytes + weight_bytes + bias_bytes),
                             16 << 20), 32 << 20))
    flops = 2 * pB * (input_size * h1 + h1 * h2 + h2 * h3 + h3 * output_size)
    bytes_accessed = (cdt * pB * input_size + 4 * pB * output_size
                      + weight_bytes + bias_bytes)

    kernel = functools.partial(dueling_dqn_kernel, acts_dtype=compute_dtype)

    out_t = pl.pallas_call(
        kernel,
        out_shape=jax.ShapeDtypeStruct((output_size, pB), jnp.float32),
        grid=grid,
        in_specs=[
            pl.BlockSpec((input_size, TB), batch_map),
            pl.BlockSpec((h1, input_size), const_map),
            pl.BlockSpec((h2, h1), const_map),
            pl.BlockSpec((h3, h2), const_map),
            pl.BlockSpec((output_size, h3), const_map),
            pl.BlockSpec((h1 + h2 + h3 + output_size, 1), const_map),
        ],
        out_specs=pl.BlockSpec((output_size, TB), batch_map),
        compiler_params=pltpu.CompilerParams(
            dimension_semantics=("parallel",),   # shard batch tiles across TCs
            vmem_limit_bytes=vmem_limit,
        ),
        cost_estimate=pl.CostEstimate(
            flops=int(flops), transcendentals=0,
            bytes_accessed=int(bytes_accessed)),
    )(xT, w1c, w2c, w3c, whc, b_col)

    return out_t[:, :B].T                        # back to [B, output_size]


def init_params(key, input_size, output_size):
    """Deterministic synthetic init (~N(0, 0.1)); PyTorch layouts [out_f, in_f]."""
    ks = jax.random.split(key, 10)

    def w(k, out_f, in_f):
        return (0.1 * jax.random.normal(k, (out_f, in_f))).astype(jnp.float32)

    def b(k, out_f):
        return (0.1 * jax.random.normal(k, (out_f,))).astype(jnp.float32)

    return {
        "w1": w(ks[0], 24, input_size), "b1": b(ks[1], 24),
        "w2": w(ks[2], 32, 24),         "b2": b(ks[3], 32),
        "w3": w(ks[4], 16, 32),         "b3": b(ks[5], 16),
        "wa": w(ks[6], output_size, 16), "ba": b(ks[7], output_size),
        "wv": w(ks[8], 1, 16),           "bv": b(ks[9], 1),
    }


def reference_forward(x, p):
    """Pure-JAX f32 reference mirroring the PyTorch module exactly."""
    hp = dict(precision="highest")
    h = _leaky_relu(jnp.dot(x, p["w1"].T, **hp) + p["b1"])
    h = _leaky_relu(jnp.dot(h, p["w2"].T, **hp) + p["b2"])
    h = _leaky_relu(jnp.dot(h, p["w3"].T, **hp) + p["b3"])
    adv = jnp.dot(h, p["wa"].T, **hp) + p["ba"]
    val = jnp.dot(h, p["wv"].T, **hp) + p["bv"]
    return val + adv - jnp.mean(adv, axis=1, keepdims=True)


if __name__ == "__main__":
    key = jax.random.PRNGKey(0)
    k_p, k_x, k_x2 = jax.random.split(key, 3)

    input_size = 8      # e.g. state-vector dimension
    output_size = 4     # e.g. number of actions
    params = init_params(k_p, input_size, output_size)

    # Small-batch check (B=2 -> single padded tile).
    x = jax.random.normal(k_x, (2, input_size), dtype=jnp.float32)
    ref = reference_forward(x, params)

    out_f32 = jax.block_until_ready(dueling_dqn_forward(x, params, use_bf16=False))
    assert out_f32.shape == (2, output_size)
    assert jnp.allclose(out_f32, ref, atol=2e-3, rtol=2e-3)   # structural check (f32 dots)

    out_bf16 = jax.block_until_ready(dueling_dqn_forward(x, params))
    assert out_bf16.shape == (2, output_size)
    assert jnp.allclose(out_bf16, ref, atol=3e-2, rtol=3e-2)  # bf16 MXU path

    # Multi-step grid check (forces batch padding + 3 grid steps).
    x2 = jax.random.normal(k_x2, (300, input_size), dtype=jnp.float32)
    ref2 = reference_forward(x2, params)

    out2_f32 = jax.block_until_ready(dueling_dqn_forward(x2, params, tb=128, use_bf16=False))
    assert out2_f32.shape == (300, output_size)
    assert jnp.allclose(out2_f32, ref2, atol=2e-3, rtol=2e-3)

    out2_bf16 = jax.block_until_ready(dueling_dqn_forward(x2, params, tb=128))
    assert out2_bf16.shape == (300, output_size)
    assert jnp.allclose(out2_bf16, ref2, atol=3e-2, rtol=3e-2)

    print("KERNEL_OK")
</pallas_src>

<mosaic_0001>
module attributes {stable_mosaic.version = 11 : i64} {
  func.func @dueling_dqn_kernel(%arg0: i32, %arg1: memref<8x128xf32, #tpu.memory_space<vmem>>, %arg2: memref<24x8xf32, #tpu.memory_space<vmem>>, %arg3: memref<32x24xf32, #tpu.memory_space<vmem>>, %arg4: memref<16x32xf32, #tpu.memory_space<vmem>>, %arg5: memref<4x16xf32, #tpu.memory_space<vmem>>, %arg6: memref<76x1xf32, #tpu.memory_space<vmem>>, %arg7: memref<4x128xf32, #tpu.memory_space<vmem>>) attributes {dimension_semantics = [#tpu.dimension_semantics<parallel>], iteration_bounds = array<i64: 1>, scalar_prefetch = 0 : i64, scratch_operands = 0 : i64, tpu.core_type = #tpu.core_type<tc>, window_params = [{transform_indices = @transform_0, window_bounds = array<i64: 8, 128>}, {pipeline_mode = #tpu.pipeline_mode<synchronous>, transform_indices = @transform_1, window_bounds = array<i64: 24, 8>}, {pipeline_mode = #tpu.pipeline_mode<synchronous>, transform_indices = @transform_2, window_bounds = array<i64: 32, 24>}, {pipeline_mode = #tpu.pipeline_mode<synchronous>, transform_indices = @transform_3, window_bounds = array<i64: 16, 32>}, {pipeline_mode = #tpu.pipeline_mode<synchronous>, transform_indices = @transform_4, window_bounds = array<i64: 4, 16>}, {pipeline_mode = #tpu.pipeline_mode<synchronous>, transform_indices = @transform_5, window_bounds = array<i64: 76, 1>}, {transform_indices = @transform_6, window_bounds = array<i64: 4, 128>}]} {
    %c0 = arith.constant 0 : index
    %c0_0 = arith.constant 0 : index
    %0 = vector.load %arg6[%c0, %c0_0] : memref<76x1xf32, #tpu.memory_space<vmem>>, vector<76x1xf32>
    %1 = vector.extract_strided_slice %0 {offsets = [0, 0], sizes = [24, 1], strides = [1, 1]} : vector<76x1xf32> to vector<24x1xf32>
    %2 = vector.extract_strided_slice %0 {offsets = [24, 0], sizes = [32, 1], strides = [1, 1]} : vector<76x1xf32> to vector<32x1xf32>
    %3 = vector.extract_strided_slice %0 {offsets = [56, 0], sizes = [16, 1], strides = [1, 1]} : vector<76x1xf32> to vector<16x1xf32>
    %4 = vector.extract_strided_slice %0 {offsets = [72, 0], sizes = [4, 1], strides = [1, 1]} : vector<76x1xf32> to vector<4x1xf32>
    %c0_1 = arith.constant 0 : index
    %c0_2 = arith.constant 0 : index
    %5 = vector.load %arg1[%c0_1, %c0_2] : memref<8x128xf32, #tpu.memory_space<vmem>>, vector<8x128xf32>
    %c0_3 = arith.constant 0 : index
    %c0_4 = arith.constant 0 : index
    %6 = vector.load %arg2[%c0_3, %c0_4] : memref<24x8xf32, #tpu.memory_space<vmem>>, vector<24x8xf32>
    %cst = arith.constant dense<0.000000e+00> : vector<24x128xf32>
    %7 = tpu.matmul %6, %5, %cst {dimension_numbers = #tpu.dot_dimension_numbers<[1], [0], [0], [1], [0, 0, 1, 1], [], []>} : vector<24x8xf32>, vector<8x128xf32>, vector<24x128xf32> -> vector<24x128xf32>
    %8 = vector.broadcast %1 : vector<24x1xf32> to vector<24x128xf32>
    %9 = arith.addf %7, %8 : vector<24x128xf32>
    %cst_5 = arith.constant 0.000000e+00 : f32
    %10 = vector.broadcast %cst_5 : f32 to vector<24x128xf32>
    %11 = arith.cmpf ogt, %9, %10 : vector<24x128xf32>
    %cst_6 = arith.constant 0.00999999977 : f32
    %12 = vector.broadcast %cst_6 : f32 to vector<24x128xf32>
    %13 = arith.mulf %12, %9 : vector<24x128xf32>
    %14 = arith.select %11, %9, %13 : vector<24x128xi1>, vector<24x128xf32>
    %c0_7 = arith.constant 0 : index
    %c0_8 = arith.constant 0 : index
    %15 = vector.load %arg3[%c0_7, %c0_8] : memref<32x24xf32, #tpu.memory_space<vmem>>, vector<32x24xf32>
    %cst_9 = arith.constant dense<0.000000e+00> : vector<32x128xf32>
    %16 = tpu.matmul %15, %14, %cst_9 {dimension_numbers = #tpu.dot_dimension_numbers<[1], [0], [0], [1], [0, 0, 1, 1], [], []>} : vector<32x24xf32>, vector<24x128xf32>, vector<32x128xf32> -> vector<32x128xf32>
    %17 = vector.broadcast %2 : vector<32x1xf32> to vector<32x128xf32>
    %18 = arith.addf %16, %17 : vector<32x128xf32>
    %cst_10 = arith.constant 0.000000e+00 : f32
    %19 = vector.broadcast %cst_10 : f32 to vector<32x128xf32>
    %20 = arith.cmpf ogt, %18, %19 : vector<32x128xf32>
    %cst_11 = arith.constant 0.00999999977 : f32
    %21 = vector.broadcast %cst_11 : f32 to vector<32x128xf32>
    %22 = arith.mulf %21, %18 : vector<32x128xf32>
    %23 = arith.select %20, %18, %22 : vector<32x128xi1>, vector<32x128xf32>
    %c0_12 = arith.constant 0 : index
    %c0_13 = arith.constant 0 : index
    %24 = vector.load %arg4[%c0_12, %c0_13] : memref<16x32xf32, #tpu.memory_space<vmem>>, vector<16x32xf32>
    %cst_14 = arith.constant dense<0.000000e+00> : vector<16x128xf32>
    %25 = tpu.matmul %24, %23, %cst_14 {dimension_numbers = #tpu.dot_dimension_numbers<[1], [0], [0], [1], [0, 0, 1, 1], [], []>} : vector<16x32xf32>, vector<32x128xf32>, vector<16x128xf32> -> vector<16x128xf32>
    %26 = vector.broadcast %3 : vector<16x1xf32> to vector<16x128xf32>
    %27 = arith.addf %25, %26 : vector<16x128xf32>
    %cst_15 = arith.constant 0.000000e+00 : f32
    %28 = vector.broadcast %cst_15 : f32 to vector<16x128xf32>
    %29 = arith.cmpf ogt, %27, %28 : vector<16x128xf32>
    %cst_16 = arith.constant 0.00999999977 : f32
    %30 = vector.broadcast %cst_16 : f32 to vector<16x128xf32>
    %31 = arith.mulf %30, %27 : vector<16x128xf32>
    %32 = arith.select %29, %27, %31 : vector<16x128xi1>, vector<16x128xf32>
    %c0_17 = arith.constant 0 : index
    %c0_18 = arith.constant 0 : index
    %33 = vector.load %arg5[%c0_17, %c0_18] : memref<4x16xf32, #tpu.memory_space<vmem>>, vector<4x16xf32>
    %cst_19 = arith.constant dense<0.000000e+00> : vector<4x128xf32>
    %34 = tpu.matmul %33, %32, %cst_19 {dimension_numbers = #tpu.dot_dimension_numbers<[1], [0], [0], [1], [0, 0, 1, 1], [], []>} : vector<4x16xf32>, vector<16x128xf32>, vector<4x128xf32> -> vector<4x128xf32>
    %35 = vector.broadcast %4 : vector<4x1xf32> to vector<4x128xf32>
    %36 = arith.addf %34, %35 : vector<4x128xf32>
    %c0_20 = arith.constant 0 : index
    %c0_21 = arith.constant 0 : index
    %37 = vector.load %arg7[%c0_20, %c0_21] : memref<4x128xf32, #tpu.memory_space<vmem>>, vector<4x128xf32>
    tpu.vector_store %arg7[%c0_20, %c0_21], %36 {strides = array<i32>} : memref<4x128xf32, #tpu.memory_space<vmem>>, vector<4x128xf32>,
    return
  }
  func.func @transform_0(%arg0: i32) -> (i32, i32) {
    %c0_i32 = arith.constant 0 : i32
    %c0_i32_0 = arith.constant 0 : i32
    return %c0_i32, %arg0 : i32, i32
  }
  func.func @transform_1(%arg0: i32) -> (i32, i32) {
    %c0_i32 = arith.constant 0 : i32
    %c0_i32_0 = arith.constant 0 : i32
    %c0_i32_1 = arith.constant 0 : i32
    return %c0_i32, %c0_i32_0 : i32, i32
  }
  func.func @transform_2(%arg0: i32) -> (i32, i32) {
    %c0_i32 = arith.constant 0 : i32
    %c0_i32_0 = arith.constant 0 : i32
    %c0_i32_1 = arith.constant 0 : i32
    return %c0_i32, %c0_i32_0 : i32, i32
  }
  func.func @transform_3(%arg0: i32) -> (i32, i32) {
    %c0_i32 = arith.constant 0 : i32
    %c0_i32_0 = arith.constant 0 : i32
    %c0_i32_1 = arith.constant 0 : i32
    return %c0_i32, %c0_i32_0 : i32, i32
  }
  func.func @transform_4(%arg0: i32) -> (i32, i32) {
    %c0_i32 = arith.constant 0 : i32
    %c0_i32_0 = arith.constant 0 : i32
    %c0_i32_1 = arith.constant 0 : i32
    return %c0_i32, %c0_i32_0 : i32, i32
  }
  func.func @transform_5(%arg0: i32) -> (i32, i32) {
    %c0_i32 = arith.constant 0 : i32
    %c0_i32_0 = arith.constant 0 : i32
    %c0_i32_1 = arith.constant 0 : i32
    return %c0_i32, %c0_i32_0 : i32, i32
  }
  func.func @transform_6(%arg0: i32) -> (i32, i32) {
    %c0_i32 = arith.constant 0 : i32
    %c0_i32_0 = arith.constant 0 : i32
    return %c0_i32, %arg0 : i32, i32
  }
}

</mosaic_0001>

<llo_original>
// kernel: tpu_custom_call.1
$region0: #{tpu_custom_call.1}
  #allocation0 [shape = 'u32[]', space=smem, size = 0x4, offset = 0x4, fixed_abs, tag = 'smem constant byte address 0x4 - core index']
  #allocation1 [shape = 'u32[144,128]{1,0:T(1,128)}', space=vmem, size = 0x12000, scoped, tag = 'internal scratch']
  %s0 = inlined_call_operand.vmem [shape: f32[8,128], index: 0, kind: input, shape index: {}]
  %s1 = inlined_call_operand.vmem [shape: f32[24,8], index: 1, kind: input, shape index: {}]
  %s2 = inlined_call_operand.vmem [shape: f32[32,24], index: 2, kind: input, shape index: {}]
  %s3 = inlined_call_operand.vmem [shape: f32[16,32], index: 3, kind: input, shape index: {}]
  %s4 = inlined_call_operand.vmem [shape: f32[4,16], index: 4, kind: input, shape index: {}]
  %s5 = inlined_call_operand.vmem [shape: f32[76,1], index: 5, kind: input, shape index: {}]
  %s6 = inlined_call_operand.hbm [shape: f32[4,128], index: 6, kind: output, shape index: {}]
  %s7 = sld [smem:[#allocation0]]
  $region34: #{tpu_custom_call.1} parent=0
    _
  %s9 = ssub.s32 1, %s7
  %s10 = scalar_select 0, %s9, %s7
  $region1: #{tpu_custom_call.1} parent=0
    #allocation2 [shape = 'u8[2048]{0}', space=vmem, size = 0x800, scoped, tag = 'output window, operand 0, single buffered']
    #allocation3 [shape = 's32[1]{0}', space=sflag, size = 0x4, scoped, tag = 'scoped memory for tpu_custom_call.1']
    %11 = vsyncpa [#allocation3], 0
    // Predicated region
    $region2: #{tpu_custom_call.1} parent=1 // pred_check
      _
    $region3: #{tpu_custom_call.1} parent=1 // pred_check_branch
      %13 = sbr.rel (0) target = $region5
    $region4: #{tpu_custom_call.1} parent=1 // pred_region
      _
    $region5: #{tpu_custom_call.1} parent=1 // pred_fallthru
      _
    // Predicated region
    $region6: #{tpu_custom_call.1} parent=1 // pred_check
      _
    $region7: #{tpu_custom_call.1} parent=1 // pred_check_branch
      %15 = sbr.rel (0) target = $region9
    $region8: #{tpu_custom_call.1} parent=1 // pred_region
      _
    $region9: #{tpu_custom_call.1} parent=1 // pred_fallthru
      _
    // Predicated region
    $region10: #{tpu_custom_call.1} parent=1 // pred_check
      _
    $region11: #{tpu_custom_call.1} parent=1 // pred_check_branch
      %17 = sbr.rel (0) target = $region13
    $region12: #{tpu_custom_call.1} parent=1 // pred_region
      _
    $region13: #{tpu_custom_call.1} parent=1 // pred_fallthru
      _
    // Predicated region
    $region14: #{tpu_custom_call.1} parent=1 // pred_check
      _
    $region15: #{tpu_custom_call.1} parent=1 // pred_check_branch
      %19 = sbr.rel (0) target = $region17
    $region16: #{tpu_custom_call.1} parent=1 // pred_region
      _
    $region17: #{tpu_custom_call.1} parent=1 // pred_fallthru
      _
    // Predicated region
    $region18: #{tpu_custom_call.1} parent=1 // pred_check
      _
    $region19: #{tpu_custom_call.1} parent=1 // pred_check_branch
      %21 = sbr.rel (0) target = $region21
    $region20: #{tpu_custom_call.1} parent=1 // pred_region
      _
    $region21: #{tpu_custom_call.1} parent=1 // pred_fallthru
      _
    // Predicated region
    $region22: #{tpu_custom_call.1} parent=1 // pred_check
      _
    $region23: #{tpu_custom_call.1} parent=1 // pred_check_branch
      %23 = sbr.rel (0) target = $region25
    $region24: #{tpu_custom_call.1} parent=1 // pred_region
      _
    $region25: #{tpu_custom_call.1} parent=1 // pred_fallthru
      _
    %v24 = vld [vmem:[%s5] sm:$0xff]
    %v25 = vld [vmem:[%s5 + $0x8] sm:$0xff]
    %v26 = vld [vmem:[%s5 + $0x10] sm:$0xff]
    %v27 = vld [vmem:[%s5 + $0x18] sm:$0xff]
    %v28 = vld [vmem:[%s5 + $0x20] sm:$0xff]
    %v29 = vld [vmem:[%s5 + $0x28] sm:$0xff]
    %v30 = vld [vmem:[%s5 + $0x30] sm:$0xff]
    %v31 = vld [vmem:[%s5 + $0x38] sm:$0xff]
    %v32 = vld [vmem:[%s5 + $0x40] sm:$0xff]
    %v33 = vld [vmem:[%s5 + $0x48] sm:$0xf]
    %v34 = vld [vmem:[%s0] sm:$0xff]
    %v35 = vld [vmem:[%s1] sm:$0xff]
    %v36 = vld [vmem:[%s1 + $0x8] sm:$0xff]
    %v37 = vld [vmem:[%s1 + $0x10] sm:$0xff]
    %39 = vset.pattern.permute.xlu0 0
    %40 = vperm.xlu0 %39, %v24
    %v41 = vpop.permute.xlu0 %40
    %44 = vset.pattern.permute.xlu0 0
    %45 = vperm.xlu0 %44, %v25
    %v46 = vpop.permute.xlu0 %45
    %49 = vset.pattern.permute.xlu0 0
    %50 = vperm.xlu0 %49, %v26
    %v51 = vpop.permute.xlu0 %50
    %vm53 = vcmask 64512
    %v55 = vsel %vm53, %v35, 0
    %v58 = vsel %vm53, %v36, 0
    %v61 = vsel %vm53, %v37, 0
    %63 = vmatprep.subr.mxu0 0.0
    %64 = vmatpush1.msra.mxu0 0.0
    %65 = vmatprep.subr.mxu0 0.0
    %66 = vmatpush1.msra.mxu0 0.0
    %67 = vmatprep.subr.mxu0 0.0
    %68 = vmatpush1.msra.mxu0 0.0
    %69 = vmatprep.subr.mxu0 0.0
    %70 = vmatpush1.msra.mxu0 0.0
    %71 = vmatprep.subr.mxu0 0.0
    %72 = vmatpush1.msra.mxu0 0.0
    %73 = vmatprep.subr.mxu0 0.0
    %74 = vmatpush1.msra.mxu0 0.0
    %75 = vmatprep.subr.mxu0 0.0
    %76 = vmatpush1.msra.mxu0 0.0
    %77 = vmatprep.subr.mxu0 0.0
    %78 = vmatpush1.msra.mxu0 0.0
    %79 = vmatprep.subr.mxu0 0.0
    %80 = vmatpush1.msra.mxu0 0.0
    %81 = vmatprep.subr.mxu0 0.0
    %82 = vmatpush1.msra.mxu0 0.0
    %83 = vmatprep.subr.mxu0 0.0
    %84 = vmatpush1.msra.mxu0 0.0
    %85 = vmatprep.subr.mxu0 0.0
    %86 = vmatpush1.msra.mxu0 0.0
    %87 = vmatprep.subr.mxu0 0.0
    %88 = vmatpush1.msra.mxu0 0.0
    %89 = vmatprep.subr.mxu0 0.0
    %90 = vmatpush1.msra.mxu0 0.0
    %91 = vmatprep.subr.mxu0 0.0
    %92 = vmatpush1.msra.mxu0 0.0
    %93 = vmatprep.subr.mxu0 0.0
    %94 = vmatpush1.msra.mxu0 %v34
    %95 = vmatprep.subr.mxu0 0.0
    %96 = vmatpush2.msra.mxu0 0.0
    %97 = vmatprep.subr.mxu0 0.0
    %98 = vmatpush2.msra.mxu0 0.0
    %99 = vmatprep.subr.mxu0 0.0
    %100 = vmatpush2.msra.mxu0 0.0
    %101 = vmatprep.subr.mxu0 0.0
    %102 = vmatpush2.msra.mxu0 0.0
    %103 = vmatprep.subr.mxu0 0.0
    %104 = vmatpush2.msra.mxu0 0.0
    %105 = vmatprep.subr.mxu0 0.0
    %106 = vmatpush2.msra.mxu0 0.0
    %107 = vmatprep.subr.mxu0 0.0
    %108 = vmatpush2.msra.mxu0 0.0
    %109 = vmatprep.subr.mxu0 0.0
    %110 = vmatpush2.msra.mxu0 0.0
    %111 = vmatprep.subr.mxu0 0.0
    %112 = vmatpush2.msra.mxu0 0.0
    %113 = vmatprep.subr.mxu0 0.0
    %114 = vmatpush2.msra.mxu0 0.0
    %115 = vmatprep.subr.mxu0 0.0
    %116 = vmatpush2.msra.mxu0 0.0
    %117 = vmatprep.subr.mxu0 0.0
    %118 = vmatpush2.msra.mxu0 0.0
    %119 = vmatprep.subr.mxu0 0.0
    %120 = vmatpush2.msra.mxu0 0.0
    %121 = vmatprep.subr.mxu0 0.0
    %122 = vmatpush2.msra.mxu0 0.0
    %123 = vmatprep.subr.mxu0 0.0
    %124 = vmatpush2.msra.mxu0 0.0
    %125 = vmatprep.subr.mxu0 0.0
    %126 = vmatpush2.msra.mxu0 0.0
    %127 = vmatprep.mubr.f32.mxu0 0.0
    %128 = vmatmul.mubr.f32.gmra.mxu0 %v55
    %v129 = vpop.f32.mrf.mxu0
    %v130 = vadd.f32 %v41, %v129
    %v131 = vpop.f32.mrf.mxu0
    %132 = vmatprep.mubr.f32.mxu0 0.0
    %133 = vmatmul.mubr.f32.gmra.mxu0 %v58
    %v134 = vpop.f32.mrf.mxu0
    %v135 = vadd.f32 %v46, %v134
    %v136 = vpop.f32.mrf.mxu0
    %137 = vmatprep.mubr.f32.mxu0 0.0
    %138 = vmatmul.mubr.f32.gmra.mxu0 %v61
    %v139 = vpop.f32.mrf.mxu0
    %v140 = vadd.f32 %v51, %v139
    %v141 = vpop.f32.mrf.mxu0
    %142 = vdwg.mxu0
    %vm143 = vcmp.gt.f32.partialorder %v130, 0.0
    %vm144 = vcmp.gt.f32.partialorder %v135, 0.0
    %vm145 = vcmp.gt.f32.partialorder %v140, 0.0
    %v146 = vmul.f32 %v130, 0.01
    %v147 = vmul.f32 %v135, 0.01
    %v148 = vmul.f32 %v140, 0.01
    %v149 = vsel %vm143, %v130, %v146
    %v150 = vsel %vm144, %v135, %v147
    %v151 = vsel %vm145, %v140, %v148
    %v152 = vld [vmem:[%s2] sm:$0xff]
    %v153 = vld [vmem:[%s2 + $0x8] sm:$0xff]
    %v154 = vld [vmem:[%s2 + $0x10] sm:$0xff]
    %v155 = vld [vmem:[%s2 + $0x18] sm:$0xff]
    %157 = vset.pattern.permute.xlu0 0
    %158 = vperm.xlu0 %157, %v27
    %v159 = vpop.permute.xlu0 %158
    %162 = vset.pattern.permute.xlu0 0
    %163 = vperm.xlu0 %162, %v28
    %v164 = vpop.permute.xlu0 %163
    %167 = vset.pattern.permute.xlu0 0
    %168 = vperm.xlu0 %167, %v29
    %v169 = vpop.permute.xlu0 %168
    %172 = vset.pattern.permute.xlu0 0
    %173 = vperm.xlu0 %172, %v30
    %v174 = vpop.permute.xlu0 %173
    %vm176 = vcmask 195584
    %v178 = vsel %vm176, %v152, 0
    %v181 = vsel %vm176, %v153, 0
    %v184 = vsel %vm176, %v154, 0
    %v187 = vsel %vm176, %v155, 0
    %189 = vmatprep.subr.mxu0 0.0
    %190 = vmatpush1.msra.mxu0 0.0
    %191 = vmatprep.subr.mxu0 0.0
    %192 = vmatpush1.msra.mxu0 0.0
    %193 = vmatprep.subr.mxu0 0.0
    %194 = vmatpush1.msra.mxu0 0.0
    %195 = vmatprep.subr.mxu0 0.0
    %196 = vmatpush1.msra.mxu0 0.0
    %197 = vmatprep.subr.mxu0 0.0
    %198 = vmatpush1.msra.mxu0 0.0
    %199 = vmatprep.subr.mxu0 0.0
    %200 = vmatpush1.msra.mxu0 0.0
    %201 = vmatprep.subr.mxu0 0.0
    %202 = vmatpush1.msra.mxu0 0.0
    %203 = vmatprep.subr.mxu0 0.0
    %204 = vmatpush1.msra.mxu0 0.0
    %205 = vmatprep.subr.mxu0 0.0
    %206 = vmatpush1.msra.mxu0 0.0
    %207 = vmatprep.subr.mxu0 0.0
    %208 = vmatpush1.msra.mxu0 0.0
    %209 = vmatprep.subr.mxu0 0.0
    %210 = vmatpush1.msra.mxu0 0.0
    %211 = vmatprep.subr.mxu0 0.0
    %212 = vmatpush1.msra.mxu0 0.0
    %213 = vmatprep.subr.mxu0 0.0
    %214 = vmatpush1.msra.mxu0 0.0
    %215 = vmatprep.subr.mxu0 0.0
    %216 = vmatpush1.msra.mxu0 %v151
    %217 = vmatprep.subr.mxu0 0.0
    %218 = vmatpush1.msra.mxu0 %v150
    %219 = vmatprep.subr.mxu0 0.0
    %220 = vmatpush1.msra.mxu0 %v149
    %221 = vmatprep.subr.mxu0 0.0
    %222 = vmatpush2.msra.mxu0 0.0
    %223 = vmatprep.subr.mxu0 0.0
    %224 = vmatpush2.msra.mxu0 0.0
    %225 = vmatprep.subr.mxu0 0.0
    %226 = vmatpush2.msra.mxu0 0.0
    %227 = vmatprep.subr.mxu0 0.0
    %228 = vmatpush2.msra.mxu0 0.0
    %229 = vmatprep.subr.mxu0 0.0
    %230 = vmatpush2.msra.mxu0 0.0
    %231 = vmatprep.subr.mxu0 0.0
    %232 = vmatpush2.msra.mxu0 0.0
    %233 = vmatprep.subr.mxu0 0.0
    %234 = vmatpush2.msra.mxu0 0.0
    %235 = vmatprep.subr.mxu0 0.0
    %236 = vmatpush2.msra.mxu0 0.0
    %237 = vmatprep.subr.mxu0 0.0
    %238 = vmatpush2.msra.mxu0 0.0
    %239 = vmatprep.subr.mxu0 0.0
    %240 = vmatpush2.msra.mxu0 0.0
    %241 = vmatprep.subr.mxu0 0.0
    %242 = vmatpush2.msra.mxu0 0.0
    %243 = vmatprep.subr.mxu0 0.0
    %244 = vmatpush2.msra.mxu0 0.0
    %245 = vmatprep.subr.mxu0 0.0
    %246 = vmatpush2.msra.mxu0 0.0
    %247 = vmatprep.subr.mxu0 0.0
    %248 = vmatpush2.msra.mxu0 0.0
    %249 = vmatprep.subr.mxu0 0.0
    %250 = vmatpush2.msra.mxu0 0.0
    %251 = vmatprep.subr.mxu0 0.0
    %252 = vmatpush2.msra.mxu0 0.0
    %253 = vmatprep.mubr.f32.mxu0 0.0
    %254 = vmatmul.mubr.f32.gmra.mxu0 %v178
    %v255 = vpop.f32.mrf.mxu0
    %v256 = vadd.f32 %v159, %v255
    %v257 = vpop.f32.mrf.mxu0
    %258 = vmatprep.mubr.f32.mxu0 0.0
    %259 = vmatmul.mubr.f32.gmra.mxu0 %v181
    %v260 = vpop.f32.mrf.mxu0
    %v261 = vadd.f32 %v164, %v260
    %v262 = vpop.f32.mrf.mxu0
    %263 = vmatprep.mubr.f32.mxu0 0.0
    %264 = vmatmul.mubr.f32.gmra.mxu0 %v184
    %v265 = vpop.f32.mrf.mxu0
    %v266 = vadd.f32 %v169, %v265
    %v267 = vpop.f32.mrf.mxu0
    %268 = vmatprep.mubr.f32.mxu0 0.0
    %269 = vmatmul.mubr.f32.gmra.mxu0 %v187
    %v270 = vpop.f32.mrf.mxu0
    %v271 = vadd.f32 %v174, %v270
    %v272 = vpop.f32.mrf.mxu0
    %273 = vdwg.mxu0
    %vm274 = vcmp.gt.f32.partialorder %v256, 0.0
    %vm275 = vcmp.gt.f32.partialorder %v261, 0.0
    %vm276 = vcmp.gt.f32.partialorder %v266, 0.0
    %vm277 = vcmp.gt.f32.partialorder %v271, 0.0
    %v278 = vmul.f32 %v256, 0.01
    %v279 = vmul.f32 %v261, 0.01
    %v280 = vmul.f32 %v266, 0.01
    %v281 = vmul.f32 %v271, 0.01
    %v282 = vsel %vm274, %v256, %v278
    %v283 = vsel %vm275, %v261, %v279
    %v284 = vsel %vm276, %v266, %v280
    %v285 = vsel %vm277, %v271, %v281
    %v286 = vld [vmem:[%s3] sm:$0xff]
    %v287 = vld [vmem:[%s3 + $0x8] sm:$0xff]
    %289 = vset.pattern.permute.xlu0 0
    %290 = vperm.xlu0 %289, %v31
    %v291 = vpop.permute.xlu0 %290
    %294 = vset.pattern.permute.xlu0 0
    %295 = vperm.xlu0 %294, %v32
    %v296 = vpop.permute.xlu0 %295
    %vm298 = vcmask 261120
    %v300 = vsel %vm298, %v286, 0
    %v303 = vsel %vm298, %v287, 0
    %305 = vmatprep.subr.mxu0 0.0
    %306 = vmatpush1.msra.mxu0 0.0
    %307 = vmatprep.subr.mxu0 0.0
    %308 = vmatpush1.msra.mxu0 0.0
    %309 = vmatprep.subr.mxu0 0.0
    %310 = vmatpush1.msra.mxu0 0.0
    %311 = vmatprep.subr.mxu0 0.0
    %312 = vmatpush1.msra.mxu0 0.0
    %313 = vmatprep.subr.mxu0 0.0
    %314 = vmatpush1.msra.mxu0 0.0
    %315 = vmatprep.subr.mxu0 0.0
    %316 = vmatpush1.msra.mxu0 0.0
    %317 = vmatprep.subr.mxu0 0.0
    %318 = vmatpush1.msra.mxu0 0.0
    %319 = vmatprep.subr.mxu0 0.0
    %320 = vmatpush1.msra.mxu0 0.0
    %321 = vmatprep.subr.mxu0 0.0
    %322 = vmatpush1.msra.mxu0 0.0
    %323 = vmatprep.subr.mxu0 0.0
    %324 = vmatpush1.msra.mxu0 0.0
    %325 = vmatprep.subr.mxu0 0.0
    %326 = vmatpush1.msra.mxu0 0.0
    %327 = vmatprep.subr.mxu0 0.0
    %328 = vmatpush1.msra.mxu0 0.0
    %329 = vmatprep.subr.mxu0 0.0
    %330 = vmatpush1.msra.mxu0 %v285
    %331 = vmatprep.subr.mxu0 0.0
    %332 = vmatpush1.msra.mxu0 %v284
    %333 = vmatprep.subr.mxu0 0.0
    %334 = vmatpush1.msra.mxu0 %v283
    %335 = vmatprep.subr.mxu0 0.0
    %336 = vmatpush1.msra.mxu0 %v282
    %337 = vmatprep.subr.mxu0 0.0
    %338 = vmatpush2.msra.mxu0 0.0
    %339 = vmatprep.subr.mxu0 0.0
    %340 = vmatpush2.msra.mxu0 0.0
    %341 = vmatprep.subr.mxu0 0.0
    %342 = vmatpush2.msra.mxu0 0.0
    %343 = vmatprep.subr.mxu0 0.0
    %344 = vmatpush2.msra.mxu0 0.0
    %345 = vmatprep.subr.mxu0 0.0
    %346 = vmatpush2.msra.mxu0 0.0
    %347 = vmatprep.subr.mxu0 0.0
    %348 = vmatpush2.msra.mxu0 0.0
    %349 = vmatprep.subr.mxu0 0.0
    %350 = vmatpush2.msra.mxu0 0.0
    %351 = vmatprep.subr.mxu0 0.0
    %352 = vmatpush2.msra.mxu0 0.0
    %353 = vmatprep.subr.mxu0 0.0
    %354 = vmatpush2.msra.mxu0 0.0
    %355 = vmatprep.subr.mxu0 0.0
    %356 = vmatpush2.msra.mxu0 0.0
    %357 = vmatprep.subr.mxu0 0.0
    %358 = vmatpush2.msra.mxu0 0.0
    %359 = vmatprep.subr.mxu0 0.0
    %360 = vmatpush2.msra.mxu0 0.0
    %361 = vmatprep.subr.mxu0 0.0
    %362 = vmatpush2.msra.mxu0 0.0
    %363 = vmatprep.subr.mxu0 0.0
    %364 = vmatpush2.msra.mxu0 0.0
    %365 = vmatprep.subr.mxu0 0.0
    %366 = vmatpush2.msra.mxu0 0.0
    %367 = vmatprep.subr.mxu0 0.0
    %368 = vmatpush2.msra.mxu0 0.0
    %369 = vmatprep.mubr.f32.mxu0 0.0
    %370 = vmatmul.mubr.f32.gmra.mxu0 %v300
    %v371 = vpop.f32.mrf.mxu0
    %v372 = vadd.f32 %v291, %v371
    %v373 = vpop.f32.mrf.mxu0
    %374 = vmatprep.mubr.f32.mxu0 0.0
    %375 = vmatmul.mubr.f32.gmra.mxu0 %v303
    %v376 = vpop.f32.mrf.mxu0
    %v377 = vadd.f32 %v296, %v376
    %v378 = vpop.f32.mrf.mxu0
    %379 = vdwg.mxu0
    %vm380 = vcmp.gt.f32.partialorder %v372, 0.0
    %vm381 = vcmp.gt.f32.partialorder %v377, 0.0
    %v382 = vmul.f32 %v372, 0.01
    %v383 = vmul.f32 %v377, 0.01
    %v384 = vsel %vm380, %v372, %v382
    %v385 = vsel %vm381, %v377, %v383
    %v386 = vld [vmem:[%s4] sm:$0xf]
    %388 = vset.pattern.permute.xlu0 0
    %389 = vperm.xlu0 %388, %v33
    %v390 = vpop.permute.xlu0 %389
    %vm392 = vcmask 130048
    %v394 = vsel %vm392, %v386, 0
    %396 = vmatprep.subr.mxu0 0.0
    %397 = vmatpush1.msra.mxu0 0.0
    %398 = vmatprep.subr.mxu0 0.0
    %399 = vmatpush1.msra.mxu0 0.0
    %400 = vmatprep.subr.mxu0 0.0
    %401 = vmatpush1.msra.mxu0 0.0
    %402 = vmatprep.subr.mxu0 0.0
    %403 = vmatpush1.msra.mxu0 0.0
    %404 = vmatprep.subr.mxu0 0.0
    %405 = vmatpush1.msra.mxu0 0.0
    %406 = vmatprep.subr.mxu0 0.0
    %407 = vmatpush1.msra.mxu0 0.0
    %408 = vmatprep.subr.mxu0 0.0
    %409 = vmatpush1.msra.mxu0 0.0
    %410 = vmatprep.subr.mxu0 0.0
    %411 = vmatpush1.msra.mxu0 0.0
    %412 = vmatprep.subr.mxu0 0.0
    %413 = vmatpush1.msra.mxu0 0.0
    %414 = vmatprep.subr.mxu0 0.0
    %415 = vmatpush1.msra.mxu0 0.0
    %416 = vmatprep.subr.mxu0 0.0
    %417 = vmatpush1.msra.mxu0 0.0
    %418 = vmatprep.subr.mxu0 0.0
    %419 = vmatpush1.msra.mxu0 0.0
    %420 = vmatprep.subr.mxu0 0.0
    %421 = vmatpush1.msra.mxu0 0.0
    %422 = vmatprep.subr.mxu0 0.0
    %423 = vmatpush1.msra.mxu0 0.0
    %424 = vmatprep.subr.mxu0 0.0
    %425 = vmatpush1.msra.mxu0 %v385
    %426 = vmatprep.subr.mxu0 0.0
    %427 = vmatpush1.msra.mxu0 %v384
    %428 = vmatprep.subr.mxu0 0.0
    %429 = vmatpush2.msra.mxu0 0.0
    %430 = vmatprep.subr.mxu0 0.0
    %431 = vmatpush2.msra.mxu0 0.0
    %432 = vmatprep.subr.mxu0 0.0
    %433 = vmatpush2.msra.mxu0 0.0
    %434 = vmatprep.subr.mxu0 0.0
    %435 = vmatpush2.msra.mxu0 0.0
    %436 = vmatprep.subr.mxu0 0.0
    %437 = vmatpush2.msra.mxu0 0.0
    %438 = vmatprep.subr.mxu0 0.0
    %439 = vmatpush2.msra.mxu0 0.0
    %440 = vmatprep.subr.mxu0 0.0
    %441 = vmatpush2.msra.mxu0 0.0
    %442 = vmatprep.subr.mxu0 0.0
    %443 = vmatpush2.msra.mxu0 0.0
    %444 = vmatprep.subr.mxu0 0.0
    %445 = vmatpush2.msra.mxu0 0.0
    %446 = vmatprep.subr.mxu0 0.0
    %447 = vmatpush2.msra.mxu0 0.0
    %448 = vmatprep.subr.mxu0 0.0
    %449 = vmatpush2.msra.mxu0 0.0
    %450 = vmatprep.subr.mxu0 0.0
    %451 = vmatpush2.msra.mxu0 0.0
    %452 = vmatprep.subr.mxu0 0.0
    %453 = vmatpush2.msra.mxu0 0.0
    %454 = vmatprep.subr.mxu0 0.0
    %455 = vmatpush2.msra.mxu0 0.0
    %456 = vmatprep.subr.mxu0 0.0
    %457 = vmatpush2.msra.mxu0 0.0
    %458 = vmatprep.subr.mxu0 0.0
    %459 = vmatpush2.msra.mxu0 0.0
    %460 = vmatprep.mubr.f32.mxu0 0.0
    %461 = vmatmul.mubr.f32.gmra.mxu0 %v394
    %v462 = vpop.f32.mrf.mxu0
    %v463 = vadd.f32 %v390, %v462
    %v464 = vpop.f32.mrf.mxu0
    %465 = vdwg.mxu0
    %466 = vst [vmem:[#allocation2] sm:$0xf] %v463
    // Predicated region
    $region26: #{tpu_custom_call.1} parent=1 // pred_check
      _
    $region27: #{tpu_custom_call.1} parent=1 // pred_check_branch
      %468 = sbr.rel (0) target = $region29
    $region28: #{tpu_custom_call.1} parent=1 // pred_region
      %s470 = ssub.s32 64, 64
      %471 = vsyncadd [#allocation3], %s470
      %s473 = sshll.u32 [#allocation2], 4
      %s474 = int_to_ptr.vmem [resolvable:$true] %s473
      %476 = dma.vmem_to_hbm [thread:$0]  %s474, 64, %s6, [#allocation3]
    $region29: #{tpu_custom_call.1} parent=1 // pred_fallthru
      _
    // Predicated region
    $region30: #{tpu_custom_call.1} parent=1 // pred_check
      _
    $region31: #{tpu_custom_call.1} parent=1 // pred_check_branch
      %478 = sbr.rel (0) target = $region33
    $region32: #{tpu_custom_call.1} parent=1 // pred_region
      %479 = dma.done [#allocation3], 64
    $region33: #{tpu_custom_call.1} parent=1 // pred_fallthru
      _
    %480 = vsyncpa [#allocation3], 1

</llo_original>
